<compile_context>
chip_gen: v6e
topology: v6e:2x2x1
jax: 0.10.0
libtpu: 0.0.40
codegen_flags: <defaults>
</compile_context>

<pallas_src>
import jax
import jax.numpy as jnp
import numpy as np
from jax.experimental import pallas as pl
from jax.experimental.pallas import tpu as pltpu


# ---------------------------------------------------------------------------
# Wrapper-built operator matrices (tiny, beta-independent)
# ---------------------------------------------------------------------------
def _build_operators(w1, b1, w2, m):
    """w1:(D,D) with y = x @ w1 + b1 (transpose of torch weight); b1,w2:(1,D)."""
    w1 = jnp.asarray(w1, jnp.float32)
    d = w1.shape[0]
    b1 = jnp.asarray(b1, jnp.float32).reshape(1, d)
    w2 = jnp.asarray(w2, jnp.float32).reshape(1, d)

    eye_m = jnp.eye(m, dtype=jnp.float32)
    # TODO(synk): for large M*D the block-diagonal W1 wastes MXU FLOPs (Mx);
    # fall back to a per-view (D,D) matmul loop if (M*D)^2*4 exceeds a few MiB.
    w1_big = jnp.kron(eye_m, w1)                                # (M*D, M*D)
    b1_big = jnp.tile(b1, (1, m))                               # (1, M*D)
    r_mat = jnp.repeat(eye_m, d, axis=1)                        # (M, M*D) beta->lanes
    w2_big = jnp.tile(w2, (1, m)).reshape(m * d, 1)             # (M*D, 1)
    s_mat = r_mat.T * w2_big                                    # (M*D, M) view scores
    e_mat = jnp.tile(jnp.eye(d, dtype=jnp.float32), (m, 1))     # (M*D, D) id stack
    return w1_big, b1_big, s_mat, r_mat, e_mat


# ---------------------------------------------------------------------------
# Pass 1 (tiled): per-batch-tile partial score sums, fully parallel grid
# ---------------------------------------------------------------------------
def _score_partial_kernel(z_ref, w1_ref, b1_ref, s_ref, part_ref):
    x = z_ref[...].astype(jnp.float32)                          # (tile_n, M*D)
    h = jnp.tanh(
        jnp.dot(x, w1_ref[...], preferred_element_type=jnp.float32) + b1_ref[...]
    )                                                           # (tile_n, M*D)
    s = jnp.dot(h, s_ref[...], preferred_element_type=jnp.float32)  # (tile_n, M)
    part_ref[...] = jnp.sum(s, axis=0, keepdims=True)[None]     # (1, 1, M)


# ---------------------------------------------------------------------------
# Pass 2 (tiled): combine = one streaming MXU matmul per batch tile
# ---------------------------------------------------------------------------
def _combine_kernel(z_ref, b_ref, out_ref):
    x = z_ref[...].astype(jnp.float32)                          # (tile_n, M*D)
    out_ref[...] = jnp.dot(
        x, b_ref[...], preferred_element_type=jnp.float32
    ).astype(out_ref.dtype)                                     # (tile_n, D)


# ---------------------------------------------------------------------------
# Fused single-launch path for small batches (z read from HBM once)
# ---------------------------------------------------------------------------
def _make_fused_kernel(n_total):
    inv_n = 1.0 / float(n_total)

    def fused_kernel(z_ref, w1_ref, b1_ref, s_ref, r_ref, e_ref, out_ref):
        x = z_ref[...].astype(jnp.float32)                      # (N, M*D)
        h = jnp.tanh(
            jnp.dot(x, w1_ref[...], preferred_element_type=jnp.float32)
            + b1_ref[...]
        )                                                       # (N, M*D)
        s = jnp.dot(h, s_ref[...], preferred_element_type=jnp.float32)  # (N, M)
        w = jnp.sum(s, axis=0, keepdims=True) * inv_n           # (1, M) batch mean
        w_max = jnp.max(w, axis=-1, keepdims=True)
        ew = jnp.exp(w - w_max)
        beta = ew * pl.reciprocal(jnp.sum(ew, axis=-1, keepdims=True), approx=False)
        beta_lanes = jnp.dot(beta, r_ref[...], preferred_element_type=jnp.float32)  # (1, M*D)
        out = jnp.dot(x * beta_lanes, e_ref[...], preferred_element_type=jnp.float32)
        out_ref[...] = out.astype(out_ref.dtype)                # (N, D)

    return fused_kernel


# ---------------------------------------------------------------------------
# Tiling helpers
# ---------------------------------------------------------------------------
def _pick_tile_n(n, max_tile, sub):
    max_tile = max(sub, max_tile - max_tile % sub)
    if n <= max_tile:
        return ((n + sub - 1) // sub) * sub
    for t in range(max_tile, sub - 1, -sub):   # prefer an exact divisor: no padding
        if n % t == 0:
            return t
    return max_tile                            # pad the tail tile


def _vmem_limit(step_bytes):
    # double-buffered working set + headroom, capped below v7x's 64 MiB VMEM
    return int(min(2 * step_bytes + (8 << 20), 64 << 20))


# ---------------------------------------------------------------------------
# Forward wrapper
# ---------------------------------------------------------------------------
def gate_forward(z, w1, b1, w2, *, max_tile_n=2048, fused_bytes_limit=2 << 20):
    N, M, D = z.shape
    MD = M * D
    z2d = z.reshape(N, MD)                                      # contiguous, free
    w1_big, b1_big, s_mat, r_mat, e_mat = _build_operators(w1, b1, w2, M)

    # ---- fused small-batch path: one launch, z read once --------------------
    if N * MD * z.dtype.itemsize <= fused_bytes_limit:
        step_bytes = (N * MD + MD * MD + MD * (M + D + 1) + N * D) * 4
        return pl.pallas_call(
            _make_fused_kernel(N),
            out_shape=jax.ShapeDtypeStruct((N, D), z.dtype),
            grid_spec=pltpu.PrefetchScalarGridSpec(
                num_scalar_prefetch=0,
                grid=(1,),
                in_specs=[
                    pl.BlockSpec((N, MD), lambda i: (0, 0)),
                    pl.BlockSpec((MD, MD), lambda i: (0, 0)),
                    pl.BlockSpec((1, MD), lambda i: (0, 0)),
                    pl.BlockSpec((MD, M), lambda i: (0, 0)),
                    pl.BlockSpec((M, MD), lambda i: (0, 0)),
                    pl.BlockSpec((MD, D), lambda i: (0, 0)),
                ],
                out_specs=pl.BlockSpec((N, D), lambda i: (0, 0)),
            ),
            compiler_params=pltpu.CompilerParams(
                vmem_limit_bytes=_vmem_limit(step_bytes)
            ),
        )(z2d, w1_big, b1_big, s_mat, r_mat, e_mat)

    # ---- tiled two-pass path -------------------------------------------------
    sub = max(8, 32 // max(1, z.dtype.itemsize))                # 8 f32 / 16 bf16
    tile_n = _pick_tile_n(N, max_tile_n, sub)
    n_pad = (-N) % tile_n
    z2d_p = jnp.pad(z2d, ((0, n_pad), (0, 0))) if n_pad else z2d
    num_tiles = (N + n_pad) // tile_n

    # pass 1: per-tile partial score sums (parallel over batch tiles)
    step1 = (tile_n * MD + MD * MD + MD * (M + 1)) * 4
    partials = pl.pallas_call(
        _score_partial_kernel,
        out_shape=jax.ShapeDtypeStruct((num_tiles, 1, M), jnp.float32),
        grid_spec=pltpu.PrefetchScalarGridSpec(
            num_scalar_prefetch=0,
            grid=(num_tiles,),
            in_specs=[
                pl.BlockSpec((tile_n, MD), lambda i: (i, 0)),
                pl.BlockSpec((MD, MD), lambda i: (0, 0)),
                pl.BlockSpec((1, MD), lambda i: (0, 0)),
                pl.BlockSpec((MD, M), lambda i: (0, 0)),
            ],
            out_specs=pl.BlockSpec((1, 1, M), lambda i: (i, 0, 0)),
        ),
        compiler_params=pltpu.CompilerParams(
            dimension_semantics=("parallel",),
            vmem_limit_bytes=_vmem_limit(step1),
        ),
    )(z2d_p, w1_big, b1_big, s_mat)

    # tiny epilogue in the wrapper: pad-corrected mean over batch + softmax over views
    w_sum = jnp.sum(partials.reshape(num_tiles, M), axis=0)     # (M,)
    if n_pad:
        s0 = jnp.sum(jnp.tanh(b1_big[0, :D]) * s_mat[:D, 0])    # score of an all-zero row
        w_sum = w_sum - n_pad * s0
    beta = jax.nn.softmax(w_sum / np.float32(N))                # (M,)

    # combine operator: beta-scaled identity stack -> pass 2 is one matmul/tile
    b_mat = (beta[:, None, None] * jnp.eye(D, dtype=jnp.float32)[None]).reshape(MD, D)

    step2 = (tile_n * MD + MD * D + tile_n * D) * 4
    out = pl.pallas_call(
        _combine_kernel,
        out_shape=jax.ShapeDtypeStruct((N + n_pad, D), z.dtype),
        grid_spec=pltpu.PrefetchScalarGridSpec(
            num_scalar_prefetch=0,
            grid=(num_tiles,),
            in_specs=[
                pl.BlockSpec((tile_n, MD), lambda i: (i, 0)),
                pl.BlockSpec((MD, D), lambda i: (0, 0)),
            ],
            out_specs=pl.BlockSpec((tile_n, D), lambda i: (i, 0)),
        ),
        compiler_params=pltpu.CompilerParams(
            dimension_semantics=("parallel",),
            vmem_limit_bytes=_vmem_limit(step2),
        ),
    )(z2d_p, b_mat)
    return out[:N] if n_pad else out


# ---------------------------------------------------------------------------
# Pure-JAX reference mirroring the PyTorch forward
# ---------------------------------------------------------------------------
def gate_reference(z, w1, b1, w2):
    s = jnp.tanh(jnp.einsum("nmd,de->nme", z, w1) + b1.reshape(1, 1, -1))
    s = jnp.sum(s * w2.reshape(1, 1, -1), axis=-1, keepdims=True)   # (N, M, 1)
    w = jnp.mean(s, axis=0)                                         # (M, 1)
    beta = jax.nn.softmax(w, axis=0)                                # (M, 1)
    return jnp.sum(beta[None, :, :] * z, axis=1)                    # (N, D)


if __name__ == "__main__":
    # batch=16, views=4, in_size=32
    N, M, D = 16, 4, 32

    key = jax.random.PRNGKey(0)
    kz, kw1, kb1, kw2 = jax.random.split(key, 4)

    z = jax.random.normal(kz, (N, M, D), dtype=jnp.float32)
    w1 = jax.random.normal(kw1, (D, D), dtype=jnp.float32) * (1.0 / np.sqrt(D))
    b1 = jax.random.normal(kb1, (1, D), dtype=jnp.float32) * 0.01
    w2 = jax.random.normal(kw2, (1, D), dtype=jnp.float32) * (1.0 / np.sqrt(D))

    ref = jax.block_until_ready(gate_reference(z, w1, b1, w2))

    # 1) fused single-launch path (small batch)
    out_fused = jax.block_until_ready(gate_forward(z, w1, b1, w2))
    # 2) tiled two-pass path (forced), batch divides tile
    out_tiled = jax.block_until_ready(
        gate_forward(z, w1, b1, w2, max_tile_n=8, fused_bytes_limit=0)
    )
    # 3) tiled path with a zero-padded tail tile (N=20 not divisible by 8)
    z20 = jax.random.normal(kz, (20, M, D), dtype=jnp.float32)
    ref20 = jax.block_until_ready(gate_reference(z20, w1, b1, w2))
    out20 = jax.block_until_ready(
        gate_forward(z20, w1, b1, w2, max_tile_n=8, fused_bytes_limit=0)
    )

    ok = (
        np.allclose(np.asarray(out_fused), np.asarray(ref), atol=1e-5, rtol=1e-5)
        and np.allclose(np.asarray(out_tiled), np.asarray(ref), atol=1e-5, rtol=1e-5)
        and np.allclose(np.asarray(out20), np.asarray(ref20), atol=1e-5, rtol=1e-5)
    )
    if not ok:
        raise AssertionError("Pallas Gate kernel output does not match reference")
    print("KERNEL_OK")
</pallas_src>

<mosaic_0001>
module attributes {stable_mosaic.version = 11 : i64} {
  func.func @fused_kernel(%arg0: i32, %arg1: memref<16x128xf32, #tpu.memory_space<vmem>>, %arg2: memref<128x128xf32, #tpu.memory_space<vmem>>, %arg3: memref<1x128xf32, #tpu.memory_space<vmem>>, %arg4: memref<128x4xf32, #tpu.memory_space<vmem>>, %arg5: memref<4x128xf32, #tpu.memory_space<vmem>>, %arg6: memref<128x32xf32, #tpu.memory_space<vmem>>, %arg7: memref<16x32xf32, #tpu.memory_space<vmem>>) attributes {dimension_semantics = [#tpu.dimension_semantics<arbitrary>], iteration_bounds = array<i64: 1>, scalar_prefetch = 0 : i64, scratch_operands = 0 : i64, tpu.core_type = #tpu.core_type<tc>, window_params = [{pipeline_mode = #tpu.pipeline_mode<synchronous>, transform_indices = @transform_0, window_bounds = array<i64: 16, 128>}, {pipeline_mode = #tpu.pipeline_mode<synchronous>, transform_indices = @transform_1, window_bounds = array<i64: 128, 128>}, {pipeline_mode = #tpu.pipeline_mode<synchronous>, transform_indices = @transform_2, window_bounds = array<i64: 1, 128>}, {pipeline_mode = #tpu.pipeline_mode<synchronous>, transform_indices = @transform_3, window_bounds = array<i64: 128, 4>}, {pipeline_mode = #tpu.pipeline_mode<synchronous>, transform_indices = @transform_4, window_bounds = array<i64: 4, 128>}, {pipeline_mode = #tpu.pipeline_mode<synchronous>, transform_indices = @transform_5, window_bounds = array<i64: 128, 32>}, {pipeline_mode = #tpu.pipeline_mode<synchronous>, transform_indices = @transform_6, window_bounds = array<i64: 16, 32>}]} {
    %c0 = arith.constant 0 : index
    %c0_0 = arith.constant 0 : index
    %0 = vector.load %arg1[%c0, %c0_0] : memref<16x128xf32, #tpu.memory_space<vmem>>, vector<16x128xf32>
    %c0_1 = arith.constant 0 : index
    %c0_2 = arith.constant 0 : index
    %1 = vector.load %arg2[%c0_1, %c0_2] : memref<128x128xf32, #tpu.memory_space<vmem>>, vector<128x128xf32>
    %cst = arith.constant dense<0.000000e+00> : vector<16x128xf32>
    %2 = tpu.matmul %0, %1, %cst {dimension_numbers = #tpu.dot_dimension_numbers<[1], [0], [0], [1], [0, 0, 1, 1], [], []>} : vector<16x128xf32>, vector<128x128xf32>, vector<16x128xf32> -> vector<16x128xf32>
    %c0_3 = arith.constant 0 : index
    %c0_4 = arith.constant 0 : index
    %3 = vector.load %arg3[%c0_3, %c0_4] : memref<1x128xf32, #tpu.memory_space<vmem>>, vector<1x128xf32>
    %4 = vector.broadcast %3 : vector<1x128xf32> to vector<16x128xf32>
    %5 = arith.addf %2, %4 : vector<16x128xf32>
    %6 = math.tanh %5 : vector<16x128xf32>
    %c0_5 = arith.constant 0 : index
    %c0_6 = arith.constant 0 : index
    %7 = vector.load %arg4[%c0_5, %c0_6] : memref<128x4xf32, #tpu.memory_space<vmem>>, vector<128x4xf32>
    %cst_7 = arith.constant dense<0.000000e+00> : vector<16x4xf32>
    %8 = tpu.matmul %6, %7, %cst_7 {dimension_numbers = #tpu.dot_dimension_numbers<[1], [0], [0], [1], [0, 0, 1, 1], [], []>} : vector<16x128xf32>, vector<128x4xf32>, vector<16x4xf32> -> vector<16x4xf32>
    %cst_8 = arith.constant dense<0.000000e+00> : vector<4xf32>
    %9 = vector.multi_reduction <add>, %8, %cst_8 [0] : vector<16x4xf32> to vector<4xf32>
    %10 = vector.shape_cast %9 : vector<4xf32> to vector<1x4xf32>
    %cst_9 = arith.constant 6.250000e-02 : f32
    %11 = vector.broadcast %cst_9 : f32 to vector<1x4xf32>
    %12 = arith.mulf %10, %11 : vector<1x4xf32>
    %cst_10 = arith.constant dense<0xFF800000> : vector<1xf32>
    %13 = vector.multi_reduction <maximumf>, %12, %cst_10 [1] : vector<1x4xf32> to vector<1xf32>
    %14 = vector.shape_cast %13 : vector<1xf32> to vector<1x1xf32>
    %15 = vector.broadcast %14 : vector<1x1xf32> to vector<1x4xf32>
    %16 = arith.subf %12, %15 : vector<1x4xf32>
    %17 = math.exp %16 : vector<1x4xf32>
    %cst_11 = arith.constant dense<0.000000e+00> : vector<1xf32>
    %18 = vector.multi_reduction <add>, %17, %cst_11 [1] : vector<1x4xf32> to vector<1xf32>
    %19 = vector.shape_cast %18 : vector<1xf32> to vector<1x1xf32>
    %20 = tpu.reciprocal %19 : vector<1x1xf32> -> vector<1x1xf32>
    %21 = vector.broadcast %20 : vector<1x1xf32> to vector<1x4xf32>
    %22 = arith.mulf %17, %21 : vector<1x4xf32>
    %c0_12 = arith.constant 0 : index
    %c0_13 = arith.constant 0 : index
    %23 = vector.load %arg5[%c0_12, %c0_13] : memref<4x128xf32, #tpu.memory_space<vmem>>, vector<4x128xf32>
    %cst_14 = arith.constant dense<0.000000e+00> : vector<1x128xf32>
    %24 = tpu.matmul %22, %23, %cst_14 {dimension_numbers = #tpu.dot_dimension_numbers<[1], [0], [0], [1], [0, 0, 1, 1], [], []>} : vector<1x4xf32>, vector<4x128xf32>, vector<1x128xf32> -> vector<1x128xf32>
    %25 = vector.broadcast %24 : vector<1x128xf32> to vector<16x128xf32>
    %26 = arith.mulf %0, %25 : vector<16x128xf32>
    %c0_15 = arith.constant 0 : index
    %c0_16 = arith.constant 0 : index
    %27 = vector.load %arg6[%c0_15, %c0_16] : memref<128x32xf32, #tpu.memory_space<vmem>>, vector<128x32xf32>
    %cst_17 = arith.constant dense<0.000000e+00> : vector<16x32xf32>
    %28 = tpu.matmul %26, %27, %cst_17 {dimension_numbers = #tpu.dot_dimension_numbers<[1], [0], [0], [1], [0, 0, 1, 1], [], []>} : vector<16x128xf32>, vector<128x32xf32>, vector<16x32xf32> -> vector<16x32xf32>
    %c0_18 = arith.constant 0 : index
    %c0_19 = arith.constant 0 : index
    %29 = vector.load %arg7[%c0_18, %c0_19] : memref<16x32xf32, #tpu.memory_space<vmem>>, vector<16x32xf32>
    tpu.vector_store %arg7[%c0_18, %c0_19], %28 {strides = array<i32>} : memref<16x32xf32, #tpu.memory_space<vmem>>, vector<16x32xf32>,
    return
  }
  func.func @transform_0(%arg0: i32) -> (i32, i32) {
    %c0_i32 = arith.constant 0 : i32
    %c0_i32_0 = arith.constant 0 : i32
    %c0_i32_1 = arith.constant 0 : i32
    return %c0_i32, %c0_i32_0 : i32, i32
  }
  func.func @transform_1(%arg0: i32) -> (i32, i32) {
    %c0_i32 = arith.constant 0 : i32
    %c0_i32_0 = arith.constant 0 : i32
    %c0_i32_1 = arith.constant 0 : i32
    return %c0_i32, %c0_i32_0 : i32, i32
  }
  func.func @transform_2(%arg0: i32) -> (i32, i32) {
    %c0_i32 = arith.constant 0 : i32
    %c0_i32_0 = arith.constant 0 : i32
    %c0_i32_1 = arith.constant 0 : i32
    return %c0_i32, %c0_i32_0 : i32, i32
  }
  func.func @transform_3(%arg0: i32) -> (i32, i32) {
    %c0_i32 = arith.constant 0 : i32
    %c0_i32_0 = arith.constant 0 : i32
    %c0_i32_1 = arith.constant 0 : i32
    return %c0_i32, %c0_i32_0 : i32, i32
  }
  func.func @transform_4(%arg0: i32) -> (i32, i32) {
    %c0_i32 = arith.constant 0 : i32
    %c0_i32_0 = arith.constant 0 : i32
    %c0_i32_1 = arith.constant 0 : i32
    return %c0_i32, %c0_i32_0 : i32, i32
  }
  func.func @transform_5(%arg0: i32) -> (i32, i32) {
    %c0_i32 = arith.constant 0 : i32
    %c0_i32_0 = arith.constant 0 : i32
    %c0_i32_1 = arith.constant 0 : i32
    return %c0_i32, %c0_i32_0 : i32, i32
  }
  func.func @transform_6(%arg0: i32) -> (i32, i32) {
    %c0_i32 = arith.constant 0 : i32
    %c0_i32_0 = arith.constant 0 : i32
    %c0_i32_1 = arith.constant 0 : i32
    return %c0_i32, %c0_i32_0 : i32, i32
  }
}

</mosaic_0001>

<llo_original>
// kernel: tpu_custom_call.1
$region0: #{tpu_custom_call.1}
  #allocation0 [shape = 'u32[]', space=smem, size = 0x4, offset = 0x4, fixed_abs, tag = 'smem constant byte address 0x4 - core index']
  #allocation1 [shape = 'u32[144,128]{1,0:T(1,128)}', space=vmem, size = 0x12000, scoped, tag = 'internal scratch']
  %s0 = inlined_call_operand.vmem [shape: f32[16,128], index: 0, kind: input, shape index: {}]
  %s1 = inlined_call_operand.vmem [shape: f32[128,128], index: 1, kind: input, shape index: {}]
  %s2 = inlined_call_operand.vmem [shape: f32[1,128], index: 2, kind: input, shape index: {}]
  %s3 = inlined_call_operand.vmem [shape: f32[128,4], index: 3, kind: input, shape index: {}]
  %s4 = inlined_call_operand.vmem [shape: f32[4,128], index: 4, kind: input, shape index: {}]
  %s5 = inlined_call_operand.vmem [shape: f32[128,32], index: 5, kind: input, shape index: {}]
  %s6 = inlined_call_operand.hbm [shape: f32[16,32], index: 6, kind: output, shape index: {}]
  %s7 = sld [smem:[#allocation0]]
  $region34: #{tpu_custom_call.1} parent=0
    _
  %s9 = ssub.s32 1, %s7
  %s10 = scalar_select 0, %s9, %s7
  $region1: #{tpu_custom_call.1} parent=0
    #allocation2 [shape = 'u8[8192]{0}', space=vmem, size = 0x2000, scoped, tag = 'output window, operand 0, single buffered']
    #allocation3 [shape = 's32[1]{0}', space=sflag, size = 0x4, scoped, tag = 'scoped memory for tpu_custom_call.1']
    %11 = vsyncpa [#allocation3], 0
    // Predicated region
    $region2: #{tpu_custom_call.1} parent=1 // pred_check
      _
    $region3: #{tpu_custom_call.1} parent=1 // pred_check_branch
      %13 = sbr.rel (0) target = $region5
    $region4: #{tpu_custom_call.1} parent=1 // pred_region
      _
    $region5: #{tpu_custom_call.1} parent=1 // pred_fallthru
      _
    // Predicated region
    $region6: #{tpu_custom_call.1} parent=1 // pred_check
      _
    $region7: #{tpu_custom_call.1} parent=1 // pred_check_branch
      %15 = sbr.rel (0) target = $region9
    $region8: #{tpu_custom_call.1} parent=1 // pred_region
      _
    $region9: #{tpu_custom_call.1} parent=1 // pred_fallthru
      _
    // Predicated region
    $region10: #{tpu_custom_call.1} parent=1 // pred_check
      _
    $region11: #{tpu_custom_call.1} parent=1 // pred_check_branch
      %17 = sbr.rel (0) target = $region13
    $region12: #{tpu_custom_call.1} parent=1 // pred_region
      _
    $region13: #{tpu_custom_call.1} parent=1 // pred_fallthru
      _
    // Predicated region
    $region14: #{tpu_custom_call.1} parent=1 // pred_check
      _
    $region15: #{tpu_custom_call.1} parent=1 // pred_check_branch
      %19 = sbr.rel (0) target = $region17
    $region16: #{tpu_custom_call.1} parent=1 // pred_region
      _
    $region17: #{tpu_custom_call.1} parent=1 // pred_fallthru
      _
    // Predicated region
    $region18: #{tpu_custom_call.1} parent=1 // pred_check
      _
    $region19: #{tpu_custom_call.1} parent=1 // pred_check_branch
      %21 = sbr.rel (0) target = $region21
    $region20: #{tpu_custom_call.1} parent=1 // pred_region
      _
    $region21: #{tpu_custom_call.1} parent=1 // pred_fallthru
      _
    // Predicated region
    $region22: #{tpu_custom_call.1} parent=1 // pred_check
      _
    $region23: #{tpu_custom_call.1} parent=1 // pred_check_branch
      %23 = sbr.rel (0) target = $region25
    $region24: #{tpu_custom_call.1} parent=1 // pred_region
      _
    $region25: #{tpu_custom_call.1} parent=1 // pred_fallthru
      _
    %v24 = vld [vmem:[%s0] sm:$0xff]
    %v25 = vld [vmem:[%s0 + $0x8] sm:$0xff]
    %v26 = vld [vmem:[%s1] sm:$0xff]
    %v27 = vld [vmem:[%s1 + $0x8] sm:$0xff]
    %v28 = vld [vmem:[%s1 + $0x10] sm:$0xff]
    %v29 = vld [vmem:[%s1 + $0x18] sm:$0xff]
    %v30 = vld [vmem:[%s1 + $0x20] sm:$0xff]
    %v31 = vld [vmem:[%s1 + $0x28] sm:$0xff]
    %v32 = vld [vmem:[%s1 + $0x30] sm:$0xff]
    %v33 = vld [vmem:[%s1 + $0x38] sm:$0xff]
    %v34 = vld [vmem:[%s1 + $0x40] sm:$0xff]
    %v35 = vld [vmem:[%s1 + $0x48] sm:$0xff]
    %v36 = vld [vmem:[%s1 + $0x50] sm:$0xff]
    %v37 = vld [vmem:[%s1 + $0x58] sm:$0xff]
    %v38 = vld [vmem:[%s1 + $0x60] sm:$0xff]
    %v39 = vld [vmem:[%s1 + $0x68] sm:$0xff]
    %v40 = vld [vmem:[%s1 + $0x70] sm:$0xff]
    %v41 = vld [vmem:[%s1 + $0x78] sm:$0xff]
    %v42 = vld [vmem:[%s2] sm:$0x1]
    %v44 = vlaneseq
    %v45 = vshrl.u32 %v44, 7
    %v46 = vsub.s32 0, %v45
    %v47 = vrot.slane %v42, %v46
    %49 = vmatprep.subr.mxu0 0.0
    %50 = vmatpush1.msra.mxu0 %v41
    %51 = vmatprep.subr.mxu0 0.0
    %52 = vmatpush1.msra.mxu0 %v40
    %53 = vmatprep.subr.mxu0 0.0
    %54 = vmatpush1.msra.mxu0 %v39
    %55 = vmatprep.subr.mxu0 0.0
    %56 = vmatpush1.msra.mxu0 %v38
    %57 = vmatprep.subr.mxu0 0.0
    %58 = vmatpush1.msra.mxu0 %v37
    %59 = vmatprep.subr.mxu0 0.0
    %60 = vmatpush1.msra.mxu0 %v36
    %61 = vmatprep.subr.mxu0 0.0
    %62 = vmatpush1.msra.mxu0 %v35
    %63 = vmatprep.subr.mxu0 0.0
    %64 = vmatpush1.msra.mxu0 %v34
    %65 = vmatprep.subr.mxu0 0.0
    %66 = vmatpush1.msra.mxu0 %v33
    %67 = vmatprep.subr.mxu0 0.0
    %68 = vmatpush1.msra.mxu0 %v32
    %69 = vmatprep.subr.mxu0 0.0
    %70 = vmatpush1.msra.mxu0 %v31
    %71 = vmatprep.subr.mxu0 0.0
    %72 = vmatpush1.msra.mxu0 %v30
    %73 = vmatprep.subr.mxu0 0.0
    %74 = vmatpush1.msra.mxu0 %v29
    %75 = vmatprep.subr.mxu0 0.0
    %76 = vmatpush1.msra.mxu0 %v28
    %77 = vmatprep.subr.mxu0 0.0
    %78 = vmatpush1.msra.mxu0 %v27
    %79 = vmatprep.subr.mxu0 0.0
    %80 = vmatpush1.msra.mxu0 %v26
    %81 = vmatprep.subr.mxu0 0.0
    %82 = vmatpush2.msra.mxu0 0.0
    %83 = vmatprep.subr.mxu0 0.0
    %84 = vmatpush2.msra.mxu0 0.0
    %85 = vmatprep.subr.mxu0 0.0
    %86 = vmatpush2.msra.mxu0 0.0
    %87 = vmatprep.subr.mxu0 0.0
    %88 = vmatpush2.msra.mxu0 0.0
    %89 = vmatprep.subr.mxu0 0.0
    %90 = vmatpush2.msra.mxu0 0.0
    %91 = vmatprep.subr.mxu0 0.0
    %92 = vmatpush2.msra.mxu0 0.0
    %93 = vmatprep.subr.mxu0 0.0
    %94 = vmatpush2.msra.mxu0 0.0
    %95 = vmatprep.subr.mxu0 0.0
    %96 = vmatpush2.msra.mxu0 0.0
    %97 = vmatprep.subr.mxu0 0.0
    %98 = vmatpush2.msra.mxu0 0.0
    %99 = vmatprep.subr.mxu0 0.0
    %100 = vmatpush2.msra.mxu0 0.0
    %101 = vmatprep.subr.mxu0 0.0
    %102 = vmatpush2.msra.mxu0 0.0
    %103 = vmatprep.subr.mxu0 0.0
    %104 = vmatpush2.msra.mxu0 0.0
    %105 = vmatprep.subr.mxu0 0.0
    %106 = vmatpush2.msra.mxu0 0.0
    %107 = vmatprep.subr.mxu0 0.0
    %108 = vmatpush2.msra.mxu0 0.0
    %109 = vmatprep.subr.mxu0 0.0
    %110 = vmatpush2.msra.mxu0 0.0
    %111 = vmatprep.subr.mxu0 0.0
    %112 = vmatpush2.msra.mxu0 0.0
    %113 = vmatprep.mubr.f32.mxu0 0.0
    %114 = vmatmul.mubr.f32.gmra.mxu0 %v24
    %v115 = vpop.f32.mrf.mxu0
    %v116 = vadd.f32 %v47, %v115
    %v117 = vpop.f32.mrf.mxu0
    %118 = vmatprep.mubr.f32.mxu0 0.0
    %119 = vmatmul.mubr.f32.gmra.mxu0 %v25
    %v120 = vpop.f32.mrf.mxu0
    %v121 = vadd.f32 %v47, %v120
    %v122 = vpop.f32.mrf.mxu0
    %123 = vdwg.mxu0
    %v124 = vtanh.pop %v116
    %v125 = vtanh.pop %v121
    %v126 = vld [vmem:[%s3] sm:$0xff]
    %v127 = vld [vmem:[%s3 + $0x8] sm:$0xff]
    %v128 = vld [vmem:[%s3 + $0x10] sm:$0xff]
    %v129 = vld [vmem:[%s3 + $0x18] sm:$0xff]
    %v130 = vld [vmem:[%s3 + $0x20] sm:$0xff]
    %v131 = vld [vmem:[%s3 + $0x28] sm:$0xff]
    %v132 = vld [vmem:[%s3 + $0x30] sm:$0xff]
    %v133 = vld [vmem:[%s3 + $0x38] sm:$0xff]
    %v134 = vld [vmem:[%s3 + $0x40] sm:$0xff]
    %v135 = vld [vmem:[%s3 + $0x48] sm:$0xff]
    %v136 = vld [vmem:[%s3 + $0x50] sm:$0xff]
    %v137 = vld [vmem:[%s3 + $0x58] sm:$0xff]
    %v138 = vld [vmem:[%s3 + $0x60] sm:$0xff]
    %v139 = vld [vmem:[%s3 + $0x68] sm:$0xff]
    %v140 = vld [vmem:[%s3 + $0x70] sm:$0xff]
    %v141 = vld [vmem:[%s3 + $0x78] sm:$0xff]
    %142 = vmatprep.subr.mxu0 0.0
    %143 = vmatpush1.msra.mxu0 %v141
    %144 = vmatprep.subr.mxu0 0.0
    %145 = vmatpush1.msra.mxu0 %v140
    %146 = vmatprep.subr.mxu0 0.0
    %147 = vmatpush1.msra.mxu0 %v139
    %148 = vmatprep.subr.mxu0 0.0
    %149 = vmatpush1.msra.mxu0 %v138
    %150 = vmatprep.subr.mxu0 0.0
    %151 = vmatpush1.msra.mxu0 %v137
    %152 = vmatprep.subr.mxu0 0.0
    %153 = vmatpush1.msra.mxu0 %v136
    %154 = vmatprep.subr.mxu0 0.0
    %155 = vmatpush1.msra.mxu0 %v135
    %156 = vmatprep.subr.mxu0 0.0
    %157 = vmatpush1.msra.mxu0 %v134
    %158 = vmatprep.subr.mxu0 0.0
    %159 = vmatpush1.msra.mxu0 %v133
    %160 = vmatprep.subr.mxu0 0.0
    %161 = vmatpush1.msra.mxu0 %v132
    %162 = vmatprep.subr.mxu0 0.0
    %163 = vmatpush1.msra.mxu0 %v131
    %164 = vmatprep.subr.mxu0 0.0
    %165 = vmatpush1.msra.mxu0 %v130
    %166 = vmatprep.subr.mxu0 0.0
    %167 = vmatpush1.msra.mxu0 %v129
    %168 = vmatprep.subr.mxu0 0.0
    %169 = vmatpush1.msra.mxu0 %v128
    %170 = vmatprep.subr.mxu0 0.0
    %171 = vmatpush1.msra.mxu0 %v127
    %172 = vmatprep.subr.mxu0 0.0
    %173 = vmatpush1.msra.mxu0 %v126
    %174 = vmatprep.subr.mxu0 0.0
    %175 = vmatpush2.msra.mxu0 0.0
    %176 = vmatprep.subr.mxu0 0.0
    %177 = vmatpush2.msra.mxu0 0.0
    %178 = vmatprep.subr.mxu0 0.0
    %179 = vmatpush2.msra.mxu0 0.0
    %180 = vmatprep.subr.mxu0 0.0
    %181 = vmatpush2.msra.mxu0 0.0
    %182 = vmatprep.subr.mxu0 0.0
    %183 = vmatpush2.msra.mxu0 0.0
    %184 = vmatprep.subr.mxu0 0.0
    %185 = vmatpush2.msra.mxu0 0.0
    %186 = vmatprep.subr.mxu0 0.0
    %187 = vmatpush2.msra.mxu0 0.0
    %188 = vmatprep.subr.mxu0 0.0
    %189 = vmatpush2.msra.mxu0 0.0
    %190 = vmatprep.subr.mxu0 0.0
    %191 = vmatpush2.msra.mxu0 0.0
    %192 = vmatprep.subr.mxu0 0.0
    %193 = vmatpush2.msra.mxu0 0.0
    %194 = vmatprep.subr.mxu0 0.0
    %195 = vmatpush2.msra.mxu0 0.0
    %196 = vmatprep.subr.mxu0 0.0
    %197 = vmatpush2.msra.mxu0 0.0
    %198 = vmatprep.subr.mxu0 0.0
    %199 = vmatpush2.msra.mxu0 0.0
    %200 = vmatprep.subr.mxu0 0.0
    %201 = vmatpush2.msra.mxu0 0.0
    %202 = vmatprep.subr.mxu0 0.0
    %203 = vmatpush2.msra.mxu0 0.0
    %204 = vmatprep.subr.mxu0 0.0
    %205 = vmatpush2.msra.mxu0 0.0
    %206 = vmatprep.mubr.f32.mxu0 0.0
    %207 = vmatmul.mubr.f32.gmra.mxu0 %v124
    %v208 = vpop.f32.mrf.mxu0
    %v209 = vadd.f32 0.0, %v208
    %v210 = vpop.f32.mrf.mxu0
    %211 = vmatprep.mubr.f32.mxu0 0.0
    %212 = vmatmul.mubr.f32.gmra.mxu0 %v125
    %v213 = vpop.f32.mrf.mxu0
    %v214 = vadd.f32 0.0, %v213
    %v215 = vpop.f32.mrf.mxu0
    %216 = vdwg.mxu0
    %vm217 = vcmask 31744
    %v218 = vsel %vm217, %v209, 0.0
    %v219 = vsel %vm217, %v214, 0.0
    %v220 = vadd.f32 %v218, %v219
    %v221 = vrot.slane %v220, 4
    %v222 = vadd.f32 %v220, %v221
    %v223 = vrot.slane %v222, 2
    %v224 = vadd.f32 %v222, %v223
    %v225 = vrot.slane %v224, 1
    %v226 = vadd.f32 %v224, %v225
    %v227 = vmul.f32 %v226, 0.0625
    %v228 = vsel %vm217, %v227, -inf
    %229 = vmax.xlane.f32.xlu0 %v228
    %v230 = vpop.xlane.xlu0 %229
    %v231 = vsub.f32 %v227, %v230
    %v232 = vmul.f32 %v231, 1.442695
    %v233 = vpow.pop %v232
    %v234 = vsel %vm217, %v233, 0.0
    %235 = vadd.xlane.f32.xlu0 %v234
    %v236 = vpop.xlane.xlu0 %235
    %v237 = vrcp.pop %v236
    %v238 = vmul.f32 %v233, %v237
    %v239 = vld [vmem:[%s4] sm:$0xf]
    %v241 = vsel %vm217, %v238, 0
    %vm243 = vcmask 1043456
    %v245 = vsel %vm243, %v239, 0
    %247 = vmatprep.subr.mxu0 0.0
    %248 = vmatpush1.msra.mxu0 0.0
    %249 = vmatprep.subr.mxu0 0.0
    %250 = vmatpush1.msra.mxu0 0.0
    %251 = vmatprep.subr.mxu0 0.0
    %252 = vmatpush1.msra.mxu0 0.0
    %253 = vmatprep.subr.mxu0 0.0
    %254 = vmatpush1.msra.mxu0 0.0
    %255 = vmatprep.subr.mxu0 0.0
    %256 = vmatpush1.msra.mxu0 0.0
    %257 = vmatprep.subr.mxu0 0.0
    %258 = vmatpush1.msra.mxu0 0.0
    %259 = vmatprep.subr.mxu0 0.0
    %260 = vmatpush1.msra.mxu0 0.0
    %261 = vmatprep.subr.mxu0 0.0
    %262 = vmatpush1.msra.mxu0 0.0
    %263 = vmatprep.subr.mxu0 0.0
    %264 = vmatpush1.msra.mxu0 0.0
    %265 = vmatprep.subr.mxu0 0.0
    %266 = vmatpush1.msra.mxu0 0.0
    %267 = vmatprep.subr.mxu0 0.0
    %268 = vmatpush1.msra.mxu0 0.0
    %269 = vmatprep.subr.mxu0 0.0
    %270 = vmatpush1.msra.mxu0 0.0
    %271 = vmatprep.subr.mxu0 0.0
    %272 = vmatpush1.msra.mxu0 0.0
    %273 = vmatprep.subr.mxu0 0.0
    %274 = vmatpush1.msra.mxu0 0.0
    %275 = vmatprep.subr.mxu0 0.0
    %276 = vmatpush1.msra.mxu0 0.0
    %277 = vmatprep.subr.mxu0 0.0
    %278 = vmatpush1.msra.mxu0 %v245
    %279 = vmatprep.subr.mxu0 0.0
    %280 = vmatpush2.msra.mxu0 0.0
    %281 = vmatprep.subr.mxu0 0.0
    %282 = vmatpush2.msra.mxu0 0.0
    %283 = vmatprep.subr.mxu0 0.0
    %284 = vmatpush2.msra.mxu0 0.0
    %285 = vmatprep.subr.mxu0 0.0
    %286 = vmatpush2.msra.mxu0 0.0
    %287 = vmatprep.subr.mxu0 0.0
    %288 = vmatpush2.msra.mxu0 0.0
    %289 = vmatprep.subr.mxu0 0.0
    %290 = vmatpush2.msra.mxu0 0.0
    %291 = vmatprep.subr.mxu0 0.0
    %292 = vmatpush2.msra.mxu0 0.0
    %293 = vmatprep.subr.mxu0 0.0
    %294 = vmatpush2.msra.mxu0 0.0
    %295 = vmatprep.subr.mxu0 0.0
    %296 = vmatpush2.msra.mxu0 0.0
    %297 = vmatprep.subr.mxu0 0.0
    %298 = vmatpush2.msra.mxu0 0.0
    %299 = vmatprep.subr.mxu0 0.0
    %300 = vmatpush2.msra.mxu0 0.0
    %301 = vmatprep.subr.mxu0 0.0
    %302 = vmatpush2.msra.mxu0 0.0
    %303 = vmatprep.subr.mxu0 0.0
    %304 = vmatpush2.msra.mxu0 0.0
    %305 = vmatprep.subr.mxu0 0.0
    %306 = vmatpush2.msra.mxu0 0.0
    %307 = vmatprep.subr.mxu0 0.0
    %308 = vmatpush2.msra.mxu0 0.0
    %309 = vmatprep.subr.mxu0 0.0
    %310 = vmatpush2.msra.mxu0 0.0
    %311 = vmatprep.mubr.f32.mxu0 0.0
    %312 = vmatmul.mubr.f32.gmra.mxu0 %v241
    %v313 = vpop.f32.mrf.mxu0
    %v314 = vadd.f32 0.0, %v313
    %v315 = vpop.f32.mrf.mxu0
    %316 = vdwg.mxu0
    %v317 = vlaneseq
    %v318 = vshrl.u32 %v317, 7
    %v319 = vsub.s32 0, %v318
    %v320 = vrot.slane %v314, %v319
    %v321 = vmul.f32 %v24, %v320
    %v322 = vmul.f32 %v25, %v320
    %v323 = vld [vmem:[%s5] sm:$0xff]
    %v324 = vld [vmem:[%s5 + $0x8] sm:$0xff]
    %v325 = vld [vmem:[%s5 + $0x10] sm:$0xff]
    %v326 = vld [vmem:[%s5 + $0x18] sm:$0xff]
    %v327 = vld [vmem:[%s5 + $0x20] sm:$0xff]
    %v328 = vld [vmem:[%s5 + $0x28] sm:$0xff]
    %v329 = vld [vmem:[%s5 + $0x30] sm:$0xff]
    %v330 = vld [vmem:[%s5 + $0x38] sm:$0xff]
    %v331 = vld [vmem:[%s5 + $0x40] sm:$0xff]
    %v332 = vld [vmem:[%s5 + $0x48] sm:$0xff]
    %v333 = vld [vmem:[%s5 + $0x50] sm:$0xff]
    %v334 = vld [vmem:[%s5 + $0x58] sm:$0xff]
    %v335 = vld [vmem:[%s5 + $0x60] sm:$0xff]
    %v336 = vld [vmem:[%s5 + $0x68] sm:$0xff]
    %v337 = vld [vmem:[%s5 + $0x70] sm:$0xff]
    %v338 = vld [vmem:[%s5 + $0x78] sm:$0xff]
    %339 = vmatprep.subr.mxu0 0.0
    %340 = vmatpush1.msra.mxu0 %v338
    %341 = vmatprep.subr.mxu0 0.0
    %342 = vmatpush1.msra.mxu0 %v337
    %343 = vmatprep.subr.mxu0 0.0
    %344 = vmatpush1.msra.mxu0 %v336
    %345 = vmatprep.subr.mxu0 0.0
    %346 = vmatpush1.msra.mxu0 %v335
    %347 = vmatprep.subr.mxu0 0.0
    %348 = vmatpush1.msra.mxu0 %v334
    %349 = vmatprep.subr.mxu0 0.0
    %350 = vmatpush1.msra.mxu0 %v333
    %351 = vmatprep.subr.mxu0 0.0
    %352 = vmatpush1.msra.mxu0 %v332
    %353 = vmatprep.subr.mxu0 0.0
    %354 = vmatpush1.msra.mxu0 %v331
    %355 = vmatprep.subr.mxu0 0.0
    %356 = vmatpush1.msra.mxu0 %v330
    %357 = vmatprep.subr.mxu0 0.0
    %358 = vmatpush1.msra.mxu0 %v329
    %359 = vmatprep.subr.mxu0 0.0
    %360 = vmatpush1.msra.mxu0 %v328
    %361 = vmatprep.subr.mxu0 0.0
    %362 = vmatpush1.msra.mxu0 %v327
    %363 = vmatprep.subr.mxu0 0.0
    %364 = vmatpush1.msra.mxu0 %v326
    %365 = vmatprep.subr.mxu0 0.0
    %366 = vmatpush1.msra.mxu0 %v325
    %367 = vmatprep.subr.mxu0 0.0
    %368 = vmatpush1.msra.mxu0 %v324
    %369 = vmatprep.subr.mxu0 0.0
    %370 = vmatpush1.msra.mxu0 %v323
    %371 = vmatprep.subr.mxu0 0.0
    %372 = vmatpush2.msra.mxu0 0.0
    %373 = vmatprep.subr.mxu0 0.0
    %374 = vmatpush2.msra.mxu0 0.0
    %375 = vmatprep.subr.mxu0 0.0
    %376 = vmatpush2.msra.mxu0 0.0
    %377 = vmatprep.subr.mxu0 0.0
    %378 = vmatpush2.msra.mxu0 0.0
    %379 = vmatprep.subr.mxu0 0.0
    %380 = vmatpush2.msra.mxu0 0.0
    %381 = vmatprep.subr.mxu0 0.0
    %382 = vmatpush2.msra.mxu0 0.0
    %383 = vmatprep.subr.mxu0 0.0
    %384 = vmatpush2.msra.mxu0 0.0
    %385 = vmatprep.subr.mxu0 0.0
    %386 = vmatpush2.msra.mxu0 0.0
    %387 = vmatprep.subr.mxu0 0.0
    %388 = vmatpush2.msra.mxu0 0.0
    %389 = vmatprep.subr.mxu0 0.0
    %390 = vmatpush2.msra.mxu0 0.0
    %391 = vmatprep.subr.mxu0 0.0
    %392 = vmatpush2.msra.mxu0 0.0
    %393 = vmatprep.subr.mxu0 0.0
    %394 = vmatpush2.msra.mxu0 0.0
    %395 = vmatprep.subr.mxu0 0.0
    %396 = vmatpush2.msra.mxu0 0.0
    %397 = vmatprep.subr.mxu0 0.0
    %398 = vmatpush2.msra.mxu0 0.0
    %399 = vmatprep.subr.mxu0 0.0
    %400 = vmatpush2.msra.mxu0 0.0
    %401 = vmatprep.subr.mxu0 0.0
    %402 = vmatpush2.msra.mxu0 0.0
    %403 = vmatprep.mubr.f32.mxu0 0.0
    %404 = vmatmul.mubr.f32.gmra.mxu0 %v321
    %v405 = vpop.f32.mrf.mxu0
    %v406 = vadd.f32 0.0, %v405
    %v407 = vpop.f32.mrf.mxu0
    %408 = vmatprep.mubr.f32.mxu0 0.0
    %409 = vmatmul.mubr.f32.gmra.mxu0 %v322
    %v410 = vpop.f32.mrf.mxu0
    %v411 = vadd.f32 0.0, %v410
    %v412 = vpop.f32.mrf.mxu0
    %413 = vdwg.mxu0
    %vm414 = vcmask 261120
    %415 = vst.msk [vmem:[#allocation2] sm:$0xff] %vm414, %v406
    %416 = vst.msk [vmem:[#allocation2 + $0x8] sm:$0xff] %vm414, %v411
    // Predicated region
    $region26: #{tpu_custom_call.1} parent=1 // pred_check
      _
    $region27: #{tpu_custom_call.1} parent=1 // pred_check_branch
      %418 = sbr.rel (0) target = $region29
    $region28: #{tpu_custom_call.1} parent=1 // pred_region
      %s420 = ssub.s32 256, 256
      %421 = vsyncadd [#allocation3], %s420
      %s422 = sshll.u32 [#allocation2], 4
      %s423 = int_to_ptr.vmem [resolvable:$true] %s422
      %428 = dma.vmem_to_hbm [thread:$0]  %s423, 256, %s6, [#allocation3], 128, 128, 8
    $region29: #{tpu_custom_call.1} parent=1 // pred_fallthru
      _
    // Predicated region
    $region30: #{tpu_custom_call.1} parent=1 // pred_check
      _
    $region31: #{tpu_custom_call.1} parent=1 // pred_check_branch
      %430 = sbr.rel (0) target = $region33
    $region32: #{tpu_custom_call.1} parent=1 // pred_region
      %431 = dma.done [#allocation3], 256
    $region33: #{tpu_custom_call.1} parent=1 // pred_fallthru
      _
    %432 = vsyncpa [#allocation3], 1

</llo_original>
